<compile_context>
chip_gen: v6e
topology: v6e:2x2x1
jax: 0.10.0
libtpu: 0.0.40
codegen_flags: <defaults>
</compile_context>

<pallas_src>
import math
import functools

import jax
import jax.numpy as jnp
from jax.experimental import pallas as pl
from jax.experimental.pallas import tpu as pltpu


def _fa_linear_bias_kernel(x_ref, w_ref, b_ref, o_ref, acc_ref):
    # x_ref: (tm, tk)  w_ref: (tk, tn)  b_ref: (1, tn)  o_ref: (tm, tn)
    k = pl.program_id(2)

    @pl.when(k == 0)
    def _init():
        acc_ref[...] = jnp.zeros_like(acc_ref)

    acc_ref[...] += jnp.dot(
        x_ref[...], w_ref[...], preferred_element_type=jnp.float32
    )

    @pl.when(k == pl.num_programs(2) - 1)
    def _finish():
        o_ref[...] = (acc_ref[...] + b_ref[...]).astype(o_ref.dtype)


def _fa_linear_nobias_kernel(x_ref, w_ref, o_ref, acc_ref):
    k = pl.program_id(2)

    @pl.when(k == 0)
    def _init():
        acc_ref[...] = jnp.zeros_like(acc_ref)

    acc_ref[...] += jnp.dot(
        x_ref[...], w_ref[...], preferred_element_type=jnp.float32
    )

    @pl.when(k == pl.num_programs(2) - 1)
    def _finish():
        o_ref[...] = acc_ref[...].astype(o_ref.dtype)


def _round_up(x, m):
    return ((x + m - 1) // m) * m


@functools.partial(jax.jit, static_argnames=("tm", "tn", "tk"))
def feedback_align_linear(x, weight, bias=None, *, tm=256, tn=256, tk=512):
    """Forward of FeedbackAlignLinear: y = x @ weight.T + bias.

    x:      [B, in_features]
    weight: [out_features, in_features]   (PyTorch convention)
    bias:   [out_features] or None
    """
    B, K = x.shape
    N, K_w = weight.shape
    assert K == K_w, f"in_features mismatch: {K} vs {K_w}"

    dtype = x.dtype
    itemsize = jnp.dtype(dtype).itemsize
    sublane = {4: 8, 2: 16, 1: 32}.get(itemsize, 8)

    # Clamp tiles to (aligned) problem size; keep lane/sublane alignment.
    tm = min(tm, _round_up(B, sublane))
    tn = min(tn, _round_up(N, 128))
    tk = min(tk, _round_up(K, 128))

    Mp = _round_up(B, tm)
    Np = _round_up(N, tn)
    Kp = _round_up(K, tk)

    # One-time wrapper-side transpose -> weight is [K, N], lane-dense along N.
    w_t = weight.T
    x_p = jnp.pad(x, ((0, Mp - B), (0, Kp - K))) if (Mp != B or Kp != K) else x
    w_p = (
        jnp.pad(w_t, ((0, Kp - K), (0, Np - N)))
        if (Kp != K or Np != N)
        else w_t
    )

    grid = (Mp // tm, Np // tn, Kp // tk)

    x_spec = pl.BlockSpec((tm, tk), lambda i, j, k: (i, k))
    w_spec = pl.BlockSpec((tk, tn), lambda i, j, k: (k, j))
    o_spec = pl.BlockSpec((tm, tn), lambda i, j, k: (i, j))
    out_shape = jax.ShapeDtypeStruct((Mp, Np), dtype)
    scratch = [pltpu.VMEM((tm, tn), jnp.float32)]

    cost = pl.CostEstimate(
        flops=2 * Mp * Np * Kp,
        transcendentals=0,
        bytes_accessed=itemsize * (Mp * Kp + Kp * Np + Mp * Np),
    )

    # Double-buffered x/w/out tiles + bias row + f32 accumulator, with margin.
    vmem_bytes = 2 * (tm * tk + tk * tn + tm * tn + tn) * itemsize + tm * tn * 4
    vmem_limit = int(min(max(2 * vmem_bytes, 4 << 20), 64 << 20))

    cparams = pltpu.CompilerParams(
        dimension_semantics=("parallel", "parallel", "arbitrary"),
        vmem_limit_bytes=vmem_limit,
    )

    if bias is not None:
        b_p = jnp.pad(bias, (0, Np - N)) if Np != N else bias
        b2d = b_p.reshape(1, Np).astype(jnp.float32)
        b_spec = pl.BlockSpec((1, tn), lambda i, j, k: (0, j))
        out_p = pl.pallas_call(
            _fa_linear_bias_kernel,
            out_shape=out_shape,
            grid_spec=pltpu.PrefetchScalarGridSpec(
                num_scalar_prefetch=0,
                grid=grid,
                in_specs=[x_spec, w_spec, b_spec],
                out_specs=o_spec,
                scratch_shapes=scratch,
            ),
            compiler_params=cparams,
            cost_estimate=cost,
        )(x_p, w_p, b2d)
    else:
        out_p = pl.pallas_call(
            _fa_linear_nobias_kernel,
            out_shape=out_shape,
            grid_spec=pltpu.PrefetchScalarGridSpec(
                num_scalar_prefetch=0,
                grid=grid,
                in_specs=[x_spec, w_spec],
                out_specs=o_spec,
                scratch_shapes=scratch,
            ),
            compiler_params=cparams,
            cost_estimate=cost,
        )(x_p, w_p)

    return out_p[:B, :N]


def init_feedback_align_linear(key, in_features, out_features, bias=True,
                               feedback_init=0.1, dtype=jnp.float32):
    """Parameter init mirroring the PyTorch module's reset_parameters():
    kaiming_uniform_(a=sqrt(5)) -> U(-1/sqrt(fan_in), 1/sqrt(fan_in)); same
    bound for bias; weight_fa ~ N(0, feedback_init / sqrt(out_features))."""
    k_w, k_b, k_fa = jax.random.split(key, 3)
    fan_in = in_features
    bound = 1.0 / math.sqrt(fan_in)
    weight = jax.random.uniform(
        k_w, (out_features, in_features), dtype, minval=-bound, maxval=bound
    )
    b = None
    if bias:
        b = jax.random.uniform(
            k_b, (out_features,), dtype, minval=-bound, maxval=bound
        )
    fa_std = feedback_init / math.sqrt(out_features)
    # TODO(synk): weight_fa is only used by the feedback-alignment backward
    # pass (custom VJP), which is not part of this forward kernel.
    weight_fa = fa_std * jax.random.normal(
        k_fa, (out_features, in_features), dtype
    )
    return weight, b, weight_fa


if __name__ == "__main__":
    key = jax.random.PRNGKey(0)
    k_x, k_p = jax.random.split(key)

    batch = 8
    in_features = 32
    out_features = 64

    x = jax.random.normal(k_x, (batch, in_features), jnp.float32)
    weight, bias, weight_fa = init_feedback_align_linear(
        k_p, in_features, out_features, bias=True
    )

    # With bias.
    y = feedback_align_linear(x, weight, bias)
    y = jax.block_until_ready(y)
    y_ref = x @ weight.T + bias[None, :]
    assert y.shape == (batch, out_features)
    assert jnp.allclose(y, y_ref, atol=1e-5, rtol=1e-5), "mismatch vs reference"

    # Without bias.
    y_nb = feedback_align_linear(x, weight, None)
    y_nb = jax.block_until_ready(y_nb)
    y_nb_ref = x @ weight.T
    assert jnp.allclose(y_nb, y_nb_ref, atol=1e-5, rtol=1e-5), "nobias mismatch"

    print("KERNEL_OK")
</pallas_src>

<mosaic_0001>
module attributes {stable_mosaic.version = 11 : i64} {
  func.func @_fa_linear_bias_kernel(%arg0: i32, %arg1: i32, %arg2: i32, %arg3: memref<8x128xf32, #tpu.memory_space<vmem>>, %arg4: memref<128x128xf32, #tpu.memory_space<vmem>>, %arg5: memref<1x128xf32, #tpu.memory_space<vmem>>, %arg6: memref<8x128xf32, #tpu.memory_space<vmem>>, %arg7: memref<8x128xf32, #tpu.memory_space<vmem>>) attributes {dimension_semantics = [#tpu.dimension_semantics<parallel>, #tpu.dimension_semantics<parallel>, #tpu.dimension_semantics<arbitrary>], iteration_bounds = array<i64: 1, 1, 1>, scalar_prefetch = 0 : i64, scratch_operands = 1 : i64, tpu.core_type = #tpu.core_type<tc>, window_params = [{transform_indices = @transform_0, window_bounds = array<i64: 8, 128>}, {transform_indices = @transform_1, window_bounds = array<i64: 128, 128>}, {transform_indices = @transform_2, window_bounds = array<i64: 1, 128>}, {transform_indices = @transform_3, window_bounds = array<i64: 8, 128>}]} {
    %c0_i32 = arith.constant 0 : i32
    %0 = arith.cmpi eq, %arg2, %c0_i32 : i32
    %1 = arith.extui %0 : i1 to i32
    %c0_i32_0 = arith.constant 0 : i32
    %2 = arith.cmpi ne, %1, %c0_i32_0 : i32
    scf.if %2 {
      %cst_10 = arith.constant 0.000000e+00 : f32
      %12 = vector.broadcast %cst_10 : f32 to vector<8x128xf32>
      %c0_11 = arith.constant 0 : index
      %c0_12 = arith.constant 0 : index
      %13 = vector.load %arg7[%c0_11, %c0_12] : memref<8x128xf32, #tpu.memory_space<vmem>>, vector<8x128xf32>
      tpu.vector_store %arg7[%c0_11, %c0_12], %12 {strides = array<i32>} : memref<8x128xf32, #tpu.memory_space<vmem>>, vector<8x128xf32>,
    } else {
    }
    %c0 = arith.constant 0 : index
    %c0_1 = arith.constant 0 : index
    %3 = vector.load %arg7[%c0, %c0_1] : memref<8x128xf32, #tpu.memory_space<vmem>>, vector<8x128xf32>
    %c0_2 = arith.constant 0 : index
    %c0_3 = arith.constant 0 : index
    %4 = vector.load %arg3[%c0_2, %c0_3] : memref<8x128xf32, #tpu.memory_space<vmem>>, vector<8x128xf32>
    %c0_4 = arith.constant 0 : index
    %c0_5 = arith.constant 0 : index
    %5 = vector.load %arg4[%c0_4, %c0_5] : memref<128x128xf32, #tpu.memory_space<vmem>>, vector<128x128xf32>
    %cst = arith.constant dense<0.000000e+00> : vector<8x128xf32>
    %6 = tpu.matmul %4, %5, %cst {dimension_numbers = #tpu.dot_dimension_numbers<[1], [0], [0], [1], [0, 0, 1, 1], [], []>} : vector<8x128xf32>, vector<128x128xf32>, vector<8x128xf32> -> vector<8x128xf32>
    %7 = arith.addf %3, %6 : vector<8x128xf32>
    %c0_6 = arith.constant 0 : index
    %c0_7 = arith.constant 0 : index
    %8 = vector.load %arg7[%c0_6, %c0_7] : memref<8x128xf32, #tpu.memory_space<vmem>>, vector<8x128xf32>
    tpu.vector_store %arg7[%c0_6, %c0_7], %7 {strides = array<i32>} : memref<8x128xf32, #tpu.memory_space<vmem>>, vector<8x128xf32>,
    %c0_i32_8 = arith.constant 0 : i32
    %9 = arith.cmpi eq, %arg2, %c0_i32_8 : i32
    %10 = arith.extui %9 : i1 to i32
    %c0_i32_9 = arith.constant 0 : i32
    %11 = arith.cmpi ne, %10, %c0_i32_9 : i32
    scf.if %11 {
      %c0_10 = arith.constant 0 : index
      %c0_11 = arith.constant 0 : index
      %12 = vector.load %arg7[%c0_10, %c0_11] : memref<8x128xf32, #tpu.memory_space<vmem>>, vector<8x128xf32>
      %c0_12 = arith.constant 0 : index
      %c0_13 = arith.constant 0 : index
      %13 = vector.load %arg5[%c0_12, %c0_13] : memref<1x128xf32, #tpu.memory_space<vmem>>, vector<1x128xf32>
      %14 = vector.broadcast %13 : vector<1x128xf32> to vector<8x128xf32>
      %15 = arith.addf %12, %14 : vector<8x128xf32>
      %c0_14 = arith.constant 0 : index
      %c0_15 = arith.constant 0 : index
      %16 = vector.load %arg6[%c0_14, %c0_15] : memref<8x128xf32, #tpu.memory_space<vmem>>, vector<8x128xf32>
      tpu.vector_store %arg6[%c0_14, %c0_15], %15 {strides = array<i32>} : memref<8x128xf32, #tpu.memory_space<vmem>>, vector<8x128xf32>,
    } else {
    }
    return
  }
  func.func @transform_0(%arg0: i32, %arg1: i32, %arg2: i32) -> (i32, i32) {
    %c0_i32 = arith.constant 0 : i32
    return %arg0, %arg2 : i32, i32
  }
  func.func @transform_1(%arg0: i32, %arg1: i32, %arg2: i32) -> (i32, i32) {
    %c0_i32 = arith.constant 0 : i32
    return %arg2, %arg1 : i32, i32
  }
  func.func @transform_2(%arg0: i32, %arg1: i32, %arg2: i32) -> (i32, i32) {
    %c0_i32 = arith.constant 0 : i32
    %c0_i32_0 = arith.constant 0 : i32
    return %c0_i32, %arg1 : i32, i32
  }
  func.func @transform_3(%arg0: i32, %arg1: i32, %arg2: i32) -> (i32, i32) {
    %c0_i32 = arith.constant 0 : i32
    return %arg0, %arg1 : i32, i32
  }
}

</mosaic_0001>

<llo_original>
// kernel: feedback_align_linear.1
$region0: #{feedback_align_linear.1}
  #allocation0 [shape = 'u32[]', space=smem, size = 0x4, offset = 0x4, fixed_abs, tag = 'smem constant byte address 0x4 - core index']
  #allocation1 [shape = 'u32[144,128]{1,0:T(1,128)}', space=vmem, size = 0x12000, scoped, tag = 'internal scratch']
  #allocation2 [shape = 'f32[8,128]{1,0:T(8,128)}', space=vmem, size = 0x1000, scoped, tag = 'scratch operand']
  %s0 = inlined_call_operand.vmem [shape: f32[8,128], index: 0, kind: input, shape index: {}]
  %s1 = inlined_call_operand.vmem [shape: f32[128,128], index: 1, kind: input, shape index: {}]
  %s2 = inlined_call_operand.vmem [shape: f32[1,128], index: 2, kind: input, shape index: {}]
  %s3 = inlined_call_operand.hbm [shape: f32[8,128], index: 3, kind: output, shape index: {}]
  %s4 = sld [smem:[#allocation0]]
  $region30: #{feedback_align_linear.1} parent=0
    _
  %s6 = ssub.s32 1, %s4
  %s7 = scalar_select 0, %s6, %s4
  $region1: #{feedback_align_linear.1} parent=0
    #allocation3 [shape = 'u8[4096]{0}', space=vmem, size = 0x1000, scoped, tag = 'output window, operand 0, single buffered']
    #allocation4 [shape = 's32[1]{0}', space=sflag, size = 0x4, scoped, tag = 'scoped memory for feedback_align_linear.1']
    %8 = vsyncpa [#allocation4], 0
    // Predicated region
    $region2: #{feedback_align_linear.1} parent=1 // pred_check
      _
    $region3: #{feedback_align_linear.1} parent=1 // pred_check_branch
      %10 = sbr.rel (0) target = $region5
    $region4: #{feedback_align_linear.1} parent=1 // pred_region
      _
    $region5: #{feedback_align_linear.1} parent=1 // pred_fallthru
      _
    // Predicated region
    $region6: #{feedback_align_linear.1} parent=1 // pred_check
      _
    $region7: #{feedback_align_linear.1} parent=1 // pred_check_branch
      %12 = sbr.rel (0) target = $region9
    $region8: #{feedback_align_linear.1} parent=1 // pred_region
      _
    $region9: #{feedback_align_linear.1} parent=1 // pred_fallthru
      _
    // Predicated region
    $region10: #{feedback_align_linear.1} parent=1 // pred_check
      _
    $region11: #{feedback_align_linear.1} parent=1 // pred_check_branch
      %14 = sbr.rel (0) target = $region13
    $region12: #{feedback_align_linear.1} parent=1 // pred_region
      _
    $region13: #{feedback_align_linear.1} parent=1 // pred_fallthru
      _
    %p15 = scmp.eq.s32.totalorder 0, 0
    // Predicated region
    $region14: #{feedback_align_linear.1} parent=1 // pred_check
      %p16 = pneg %p15
    $region15: #{feedback_align_linear.1} parent=1 // pred_check_branch
      %18 = sbr.rel (%p16) target = $region17
    $region16: #{feedback_align_linear.1} parent=1 // pred_region
      %19 = vst [vmem:[#allocation2] sm:$0xff] 0.0
    $region17: #{feedback_align_linear.1} parent=1 // pred_fallthru
      _
    %v20 = vld [vmem:[#allocation2] sm:$0xff]
    %v21 = vld [vmem:[%s0] sm:$0xff]
    %v22 = vld [vmem:[%s1] sm:$0xff]
    %v23 = vld [vmem:[%s1 + $0x8] sm:$0xff]
    %v24 = vld [vmem:[%s1 + $0x10] sm:$0xff]
    %v25 = vld [vmem:[%s1 + $0x18] sm:$0xff]
    %v26 = vld [vmem:[%s1 + $0x20] sm:$0xff]
    %v27 = vld [vmem:[%s1 + $0x28] sm:$0xff]
    %v28 = vld [vmem:[%s1 + $0x30] sm:$0xff]
    %v29 = vld [vmem:[%s1 + $0x38] sm:$0xff]
    %v30 = vld [vmem:[%s1 + $0x40] sm:$0xff]
    %v31 = vld [vmem:[%s1 + $0x48] sm:$0xff]
    %v32 = vld [vmem:[%s1 + $0x50] sm:$0xff]
    %v33 = vld [vmem:[%s1 + $0x58] sm:$0xff]
    %v34 = vld [vmem:[%s1 + $0x60] sm:$0xff]
    %v35 = vld [vmem:[%s1 + $0x68] sm:$0xff]
    %v36 = vld [vmem:[%s1 + $0x70] sm:$0xff]
    %v37 = vld [vmem:[%s1 + $0x78] sm:$0xff]
    %38 = vmatprep.subr.mxu0 0.0
    %39 = vmatpush1.msra.mxu0 %v37
    %40 = vmatprep.subr.mxu0 0.0
    %41 = vmatpush1.msra.mxu0 %v36
    %42 = vmatprep.subr.mxu0 0.0
    %43 = vmatpush1.msra.mxu0 %v35
    %44 = vmatprep.subr.mxu0 0.0
    %45 = vmatpush1.msra.mxu0 %v34
    %46 = vmatprep.subr.mxu0 0.0
    %47 = vmatpush1.msra.mxu0 %v33
    %48 = vmatprep.subr.mxu0 0.0
    %49 = vmatpush1.msra.mxu0 %v32
    %50 = vmatprep.subr.mxu0 0.0
    %51 = vmatpush1.msra.mxu0 %v31
    %52 = vmatprep.subr.mxu0 0.0
    %53 = vmatpush1.msra.mxu0 %v30
    %54 = vmatprep.subr.mxu0 0.0
    %55 = vmatpush1.msra.mxu0 %v29
    %56 = vmatprep.subr.mxu0 0.0
    %57 = vmatpush1.msra.mxu0 %v28
    %58 = vmatprep.subr.mxu0 0.0
    %59 = vmatpush1.msra.mxu0 %v27
    %60 = vmatprep.subr.mxu0 0.0
    %61 = vmatpush1.msra.mxu0 %v26
    %62 = vmatprep.subr.mxu0 0.0
    %63 = vmatpush1.msra.mxu0 %v25
    %64 = vmatprep.subr.mxu0 0.0
    %65 = vmatpush1.msra.mxu0 %v24
    %66 = vmatprep.subr.mxu0 0.0
    %67 = vmatpush1.msra.mxu0 %v23
    %68 = vmatprep.subr.mxu0 0.0
    %69 = vmatpush1.msra.mxu0 %v22
    %70 = vmatprep.subr.mxu0 0.0
    %71 = vmatpush2.msra.mxu0 0.0
    %72 = vmatprep.subr.mxu0 0.0
    %73 = vmatpush2.msra.mxu0 0.0
    %74 = vmatprep.subr.mxu0 0.0
    %75 = vmatpush2.msra.mxu0 0.0
    %76 = vmatprep.subr.mxu0 0.0
    %77 = vmatpush2.msra.mxu0 0.0
    %78 = vmatprep.subr.mxu0 0.0
    %79 = vmatpush2.msra.mxu0 0.0
    %80 = vmatprep.subr.mxu0 0.0
    %81 = vmatpush2.msra.mxu0 0.0
    %82 = vmatprep.subr.mxu0 0.0
    %83 = vmatpush2.msra.mxu0 0.0
    %84 = vmatprep.subr.mxu0 0.0
    %85 = vmatpush2.msra.mxu0 0.0
    %86 = vmatprep.subr.mxu0 0.0
    %87 = vmatpush2.msra.mxu0 0.0
    %88 = vmatprep.subr.mxu0 0.0
    %89 = vmatpush2.msra.mxu0 0.0
    %90 = vmatprep.subr.mxu0 0.0
    %91 = vmatpush2.msra.mxu0 0.0
    %92 = vmatprep.subr.mxu0 0.0
    %93 = vmatpush2.msra.mxu0 0.0
    %94 = vmatprep.subr.mxu0 0.0
    %95 = vmatpush2.msra.mxu0 0.0
    %96 = vmatprep.subr.mxu0 0.0
    %97 = vmatpush2.msra.mxu0 0.0
    %98 = vmatprep.subr.mxu0 0.0
    %99 = vmatpush2.msra.mxu0 0.0
    %100 = vmatprep.subr.mxu0 0.0
    %101 = vmatpush2.msra.mxu0 0.0
    %102 = vmatprep.mubr.f32.mxu0 0.0
    %103 = vmatmul.mubr.f32.gmra.mxu0 %v21
    %v104 = vpop.f32.mrf.mxu0
    %v105 = vadd.f32 0.0, %v104
    %v106 = vpop.f32.mrf.mxu0
    %107 = vdwg.mxu0
    %v108 = vadd.f32 %v20, %v105
    %109 = vst [vmem:[#allocation2] sm:$0xff] %v108
    // Predicated region
    $region18: #{feedback_align_linear.1} parent=1 // pred_check
      %p110 = pneg %p15
    $region19: #{feedback_align_linear.1} parent=1 // pred_check_branch
      %112 = sbr.rel (%p110) target = $region21
    $region20: #{feedback_align_linear.1} parent=1 // pred_region
      %v113 = vld [vmem:[#allocation2] sm:$0xff]
      %v114 = vld [vmem:[%s2] sm:$0x1]
      %v116 = vlaneseq
      %v117 = vshrl.u32 %v116, 7
      %v118 = vsub.s32 0, %v117
      %v119 = vrot.slane %v114, %v118
      %v121 = vadd.f32 %v113, %v119
      %122 = vst [vmem:[#allocation3] sm:$0xff] %v121
    $region21: #{feedback_align_linear.1} parent=1 // pred_fallthru
      _
    // Predicated region
    $region22: #{feedback_align_linear.1} parent=1 // pred_check
      _
    $region23: #{feedback_align_linear.1} parent=1 // pred_check_branch
      %124 = sbr.rel (0) target = $region25
    $region24: #{feedback_align_linear.1} parent=1 // pred_region
      %s126 = ssub.s32 128, 128
      %127 = vsyncadd [#allocation4], %s126
      %s129 = sshll.u32 [#allocation3], 4
      %s130 = int_to_ptr.vmem [resolvable:$true] %s129
      %132 = dma.vmem_to_hbm [thread:$0]  %s130, 128, %s3, [#allocation4]
    $region25: #{feedback_align_linear.1} parent=1 // pred_fallthru
      _
    // Predicated region
    $region26: #{feedback_align_linear.1} parent=1 // pred_check
      _
    $region27: #{feedback_align_linear.1} parent=1 // pred_check_branch
      %134 = sbr.rel (0) target = $region29
    $region28: #{feedback_align_linear.1} parent=1 // pred_region
      %135 = dma.done [#allocation4], 128
    $region29: #{feedback_align_linear.1} parent=1 // pred_fallthru
      _
    %136 = vsyncpa [#allocation4], 1

</llo_original>
